<compile_context>
chip_gen: v7x
topology: tpu7x:2x2x1
jax: 0.10.0
libtpu: 0.0.40
codegen_flags: <defaults>
</compile_context>

<pallas_src>
import functools
from typing import List, Optional, Sequence, Tuple

import jax
import jax.numpy as jnp
from jax.experimental import pallas as pl
from jax.experimental.pallas import tpu as pltpu


_MIN_TILE_ROWS = 16  # bf16 sublane packing: one bf16 vreg is (16, 128)


def _round_up(x: int, m: int) -> int:
    return ((x + m - 1) // m) * m


def _vmem_cap_bytes() -> int:
    """Generation-aware ceiling for vmem_limit_bytes."""
    phys = None
    try:
        info = pltpu.get_tpu_info()
        phys = getattr(info, "vmem_capacity_bytes", None)
    except Exception:
        phys = None
    if phys is None:
        return 52 * 1024 * 1024            # conservative: safe on v7x's 64 MiB/TC
    if phys <= 64 * 1024 * 1024:           # v7x: 64 MiB per TensorCore
        return 52 * 1024 * 1024
    return 112 * 1024 * 1024               # v5e / v6e: 128 MiB physical VMEM


def _fused_mlp_kernel(*refs, num_layers: int):
    """Fused [Linear -> ReLU] * num_layers on one batch tile.

    refs = (x_ref, w0_ref, b0_ref, w1_ref, b1_ref, ..., o_ref)
      x_ref : (tm, D0p)    activation tile (padded feature dim)
      wL_ref: (DLp, DL+1p) full padded weight for layer L (VMEM resident)
      bL_ref: (1,  DL+1p)  padded bias row (f32)
      o_ref : (tm, DLastp) output tile
    """
    x_ref = refs[0]
    o_ref = refs[-1]
    wb = refs[1:-1]

    h = x_ref[...]
    for layer in range(num_layers):
        w = wb[2 * layer][...]
        b = wb[2 * layer + 1][...]               # (1, H) f32, broadcasts over rows
        y = jnp.dot(h.astype(w.dtype), w, preferred_element_type=jnp.float32)
        h = jnp.maximum(y + b, 0.0)              # f32 bias + ReLU epilogue
    o_ref[...] = h.astype(o_ref.dtype)


def _pad_params(params: Sequence[Tuple[jax.Array, jax.Array]], compute_dtype):
    """Zero-pad (and cast) weights/biases to lane-dense multiple-of-128 dims.

    Called ONCE per dtype (cached by CriticPallas), not per forward call.
    Zero-padded rows/columns are inert under Linear+ReLU, so results are exact.
    """
    compute_dtype = jnp.dtype(compute_dtype)
    dims = [params[0][0].shape[0]] + [w.shape[1] for (w, _) in params]
    dims_pad = [_round_up(d, 128) for d in dims]
    padded_wb = []
    for layer, (w, b) in enumerate(params):
        din, dout = w.shape
        dip, dop = dims_pad[layer], dims_pad[layer + 1]
        w_p = jnp.zeros((dip, dop), compute_dtype).at[:din, :dout].set(
            w.astype(compute_dtype))
        b_p = jnp.zeros((1, dop), jnp.float32).at[0, :dout].set(
            b.astype(jnp.float32))
        padded_wb.append((w_p, b_p))
    return tuple(padded_wb), tuple(dims), tuple(dims_pad)


def critic_forward(
    x: jax.Array,
    params: Sequence[Tuple[jax.Array, jax.Array]],
    *,
    tm: Optional[int] = None,
    compute_dtype=jnp.bfloat16,
    padded=None,
) -> jax.Array:
    """Run the fused Critic MLP via a single Pallas kernel."""
    B, D = x.shape
    num_layers = len(params)
    assert num_layers >= 1

    w_dtype = jnp.dtype(compute_dtype)
    if padded is None:
        padded = _pad_params(params, w_dtype)
    padded_wb, dims, dims_pad = padded
    assert dims[0] == D, "input feature dim mismatch with params"

    itemsize = w_dtype.itemsize
    out_itemsize = jnp.dtype(x.dtype).itemsize
    total_param_bytes = sum(
        w.size * w.dtype.itemsize + b.size * b.dtype.itemsize
        for (w, b) in padded_wb)
    max_dim = max(dims_pad)
    vmem_cap = _vmem_cap_bytes()

    # ---- batch tile (128-aligned when possible, >=16 rows for bf16) --------
    if tm is None:
        if B >= 128:
            tm = min(512, _round_up(B, 128))
        else:
            tm = _round_up(max(B, _MIN_TILE_ROWS), _MIN_TILE_ROWS)
    tm = max(_MIN_TILE_ROWS, _round_up(tm, 8))

    def _estimate(tile_m: int) -> int:
        return (
            2 * tile_m * dims_pad[0] * itemsize          # x tile (double-buffered)
            + 2 * tile_m * dims_pad[-1] * out_itemsize   # out tile (double-buffered)
            + total_param_bytes                          # params, Buffered(1)
            + 2 * tile_m * max_dim * 4                   # in-flight f32 activations
            + tile_m * max_dim * itemsize)               # cast copy for next matmul

    # Shrink the batch tile if the resident-weight design would blow the cap.
    while _estimate(tm) > vmem_cap and tm > _MIN_TILE_ROWS:
        tm = max(_MIN_TILE_ROWS, _round_up(tm // 2, _MIN_TILE_ROWS))
    # TODO(synk): add the K/N-tiled fallback (reduction axis last, 'arbitrary',
    # pl.when-initialized f32 accumulator) when params alone exceed the cap.

    B_pad = _round_up(B, tm)
    # v7x has 2 TensorCores/chip: give the 'parallel' batch axis >= 2 steps.
    if B_pad // tm == 1 and tm >= 2 * _MIN_TILE_ROWS:
        tm = _round_up(tm // 2, _MIN_TILE_ROWS)
        B_pad = _round_up(B, tm)
    grid = (B_pad // tm,)

    # ---- pad / cast the activations (only per-call data movement) ----------
    x_c = x.astype(w_dtype)
    if (B_pad, dims_pad[0]) != (B, D):
        x_p = jnp.zeros((B_pad, dims_pad[0]), w_dtype).at[:B, :D].set(x_c)
    else:
        x_p = x_c

    # ---- specs: params are VMEM-resident and single-buffered ----------------
    flat_wb = []
    wb_specs = []
    for (w_p, b_p) in padded_wb:
        dip, dop = w_p.shape
        flat_wb.extend([w_p, b_p])
        wb_specs.append(pl.BlockSpec((dip, dop), lambda i: (0, 0),
                                     pipeline_mode=pl.Buffered(1)))
        wb_specs.append(pl.BlockSpec((1, dop), lambda i: (0, 0),
                                     pipeline_mode=pl.Buffered(1)))

    vmem_limit = int(min(max(int(1.5 * _estimate(tm)), 32 * 1024 * 1024), vmem_cap))

    flops = 2 * B_pad * sum(dims_pad[l] * dims_pad[l + 1]
                            for l in range(num_layers))
    bytes_accessed = (x_p.size * x_p.dtype.itemsize
                      + total_param_bytes
                      + B_pad * dims_pad[-1] * out_itemsize)
    cost = pl.CostEstimate(flops=flops, transcendentals=0,
                           bytes_accessed=bytes_accessed)

    kernel = functools.partial(_fused_mlp_kernel, num_layers=num_layers)

    out_p = pl.pallas_call(
        kernel,
        out_shape=jax.ShapeDtypeStruct((B_pad, dims_pad[-1]), x.dtype),
        grid_spec=pltpu.PrefetchScalarGridSpec(
            num_scalar_prefetch=0,
            grid=grid,
            in_specs=[pl.BlockSpec((tm, dims_pad[0]), lambda i: (i, 0))] + wb_specs,
            out_specs=pl.BlockSpec((tm, dims_pad[-1]), lambda i: (i, 0)),
        ),
        compiler_params=pltpu.CompilerParams(
            dimension_semantics=("parallel",),
            vmem_limit_bytes=vmem_limit,
        ),
        cost_estimate=cost,
    )(x_p, *flat_wb)

    # Strip batch / feature padding.
    return out_p[:B, : dims[-1]]


class CriticPallas:
    """JAX/Pallas equivalent of the PyTorch `Critic` MLP."""

    def __init__(self, input_dim: int, hidden_dims: List[int], key: jax.Array,
                 compute_dtype=jnp.bfloat16):
        self.params = []
        prev_dim = input_dim
        for hidden_dim in hidden_dims:
            key, wk, bk = jax.random.split(key, 3)
            # Matches nn.Linear's uniform(-1/sqrt(fan_in), 1/sqrt(fan_in)) init.
            bound = 1.0 / (prev_dim ** 0.5)
            w = jax.random.uniform(
                wk, (prev_dim, hidden_dim), jnp.float32, minval=-bound, maxval=bound)
            b = jax.random.uniform(
                bk, (hidden_dim,), jnp.float32, minval=-bound, maxval=bound)
            self.params.append((w, b))
            prev_dim = hidden_dim

        self.default_compute_dtype = jnp.dtype(compute_dtype)
        # Pre-pad / pre-cast parameters once (not per forward call).
        self._pad_cache = {
            self.default_compute_dtype: _pad_params(self.params,
                                                    self.default_compute_dtype)
        }

    def _padded(self, compute_dtype):
        cd = jnp.dtype(compute_dtype)
        if cd not in self._pad_cache:
            self._pad_cache[cd] = _pad_params(self.params, cd)
        return cd, self._pad_cache[cd]

    def __call__(self, x: jax.Array, *, tm: Optional[int] = None,
                 compute_dtype=None) -> jax.Array:
        cd, padded = self._padded(
            compute_dtype if compute_dtype is not None
            else self.default_compute_dtype)
        return critic_forward(x, self.params, tm=tm, compute_dtype=cd,
                              padded=padded)


def _reference_forward(x, params):
    """Pure-JAX f32 reference for a sanity check (ReLU after every Linear)."""
    for w, b in params:
        x = jnp.maximum(x @ w + b, 0.0)
    return x


if __name__ == "__main__":
    key = jax.random.PRNGKey(0)
    k_model, k_x = jax.random.split(key)

    batch = 8
    input_dim = 32
    hidden_dims = [64, 32]

    critic = CriticPallas(input_dim, hidden_dims, k_model)
    x = jax.random.normal(k_x, (batch, input_dim), jnp.float32)

    # Default path: bf16 compute, f32 accumulation + f32 bias/ReLU epilogue.
    out_bf16 = jax.block_until_ready(critic(x))
    # Exact-comparison path: f32 compute.
    out_f32 = jax.block_until_ready(critic(x, compute_dtype=jnp.float32))

    ref = _reference_forward(x, critic.params)
    assert out_bf16.shape == (batch, hidden_dims[-1])
    assert out_f32.shape == (batch, hidden_dims[-1])
    assert jnp.allclose(out_f32, ref, atol=1e-5, rtol=1e-5), "f32 mismatch vs reference"
    # bf16 inputs/weights lose mantissa bits vs the f32 reference; f32
    # accumulation keeps the error small — loose tolerance documents that.
    assert jnp.allclose(out_bf16, ref, atol=5e-2, rtol=5e-2), "bf16 mismatch vs reference"

    print("KERNEL_OK")
</pallas_src>

<mosaic_0001>
module attributes {stable_mosaic.version = 11 : i64} {
  func.func @_fused_mlp_kernel(%arg0: i32, %arg1: memref<16x128xbf16, #tpu.memory_space<vmem>>, %arg2: memref<128x128xbf16, #tpu.memory_space<vmem>>, %arg3: memref<1x128xf32, #tpu.memory_space<vmem>>, %arg4: memref<128x128xbf16, #tpu.memory_space<vmem>>, %arg5: memref<1x128xf32, #tpu.memory_space<vmem>>, %arg6: memref<16x128xf32, #tpu.memory_space<vmem>>) attributes {dimension_semantics = [#tpu.dimension_semantics<parallel>], iteration_bounds = array<i64: 1>, scalar_prefetch = 0 : i64, scratch_operands = 0 : i64, tpu.core_type = #tpu.core_type<tc>, window_params = [{transform_indices = @transform_0, window_bounds = array<i64: 16, 128>}, {pipeline_mode = #tpu.pipeline_mode<synchronous>, transform_indices = @transform_1, window_bounds = array<i64: 128, 128>}, {pipeline_mode = #tpu.pipeline_mode<synchronous>, transform_indices = @transform_2, window_bounds = array<i64: 1, 128>}, {pipeline_mode = #tpu.pipeline_mode<synchronous>, transform_indices = @transform_3, window_bounds = array<i64: 128, 128>}, {pipeline_mode = #tpu.pipeline_mode<synchronous>, transform_indices = @transform_4, window_bounds = array<i64: 1, 128>}, {transform_indices = @transform_5, window_bounds = array<i64: 16, 128>}]} {
    %c0 = arith.constant 0 : index
    %c0_0 = arith.constant 0 : index
    %0 = vector.load %arg1[%c0, %c0_0] : memref<16x128xbf16, #tpu.memory_space<vmem>>, vector<16x128xbf16>
    %c0_1 = arith.constant 0 : index
    %c0_2 = arith.constant 0 : index
    %1 = vector.load %arg2[%c0_1, %c0_2] : memref<128x128xbf16, #tpu.memory_space<vmem>>, vector<128x128xbf16>
    %c0_3 = arith.constant 0 : index
    %c0_4 = arith.constant 0 : index
    %2 = vector.load %arg3[%c0_3, %c0_4] : memref<1x128xf32, #tpu.memory_space<vmem>>, vector<1x128xf32>
    %cst = arith.constant dense<0.000000e+00> : vector<16x128xf32>
    %3 = tpu.matmul %0, %1, %cst {dimension_numbers = #tpu.dot_dimension_numbers<[1], [0], [0], [1], [0, 0, 1, 1], [], []>} : vector<16x128xbf16>, vector<128x128xbf16>, vector<16x128xf32> -> vector<16x128xf32>
    %4 = vector.broadcast %2 : vector<1x128xf32> to vector<16x128xf32>
    %5 = arith.addf %3, %4 : vector<16x128xf32>
    %cst_5 = arith.constant 0.000000e+00 : f32
    %6 = vector.broadcast %cst_5 : f32 to vector<16x128xf32>
    %7 = arith.maximumf %5, %6 : vector<16x128xf32>
    %c0_6 = arith.constant 0 : index
    %c0_7 = arith.constant 0 : index
    %8 = vector.load %arg4[%c0_6, %c0_7] : memref<128x128xbf16, #tpu.memory_space<vmem>>, vector<128x128xbf16>
    %c0_8 = arith.constant 0 : index
    %c0_9 = arith.constant 0 : index
    %9 = vector.load %arg5[%c0_8, %c0_9] : memref<1x128xf32, #tpu.memory_space<vmem>>, vector<1x128xf32>
    %10 = arith.truncf %7 : vector<16x128xf32> to vector<16x128xbf16>
    %cst_10 = arith.constant dense<0.000000e+00> : vector<16x128xf32>
    %11 = tpu.matmul %10, %8, %cst_10 {dimension_numbers = #tpu.dot_dimension_numbers<[1], [0], [0], [1], [0, 0, 1, 1], [], []>} : vector<16x128xbf16>, vector<128x128xbf16>, vector<16x128xf32> -> vector<16x128xf32>
    %12 = vector.broadcast %9 : vector<1x128xf32> to vector<16x128xf32>
    %13 = arith.addf %11, %12 : vector<16x128xf32>
    %cst_11 = arith.constant 0.000000e+00 : f32
    %14 = vector.broadcast %cst_11 : f32 to vector<16x128xf32>
    %15 = arith.maximumf %13, %14 : vector<16x128xf32>
    %c0_12 = arith.constant 0 : index
    %c0_13 = arith.constant 0 : index
    %16 = vector.load %arg6[%c0_12, %c0_13] : memref<16x128xf32, #tpu.memory_space<vmem>>, vector<16x128xf32>
    tpu.vector_store %arg6[%c0_12, %c0_13], %15 {strides = array<i32>} : memref<16x128xf32, #tpu.memory_space<vmem>>, vector<16x128xf32>,
    return
  }
  func.func @transform_0(%arg0: i32) -> (i32, i32) {
    %c0_i32 = arith.constant 0 : i32
    %c0_i32_0 = arith.constant 0 : i32
    return %arg0, %c0_i32 : i32, i32
  }
  func.func @transform_1(%arg0: i32) -> (i32, i32) {
    %c0_i32 = arith.constant 0 : i32
    %c0_i32_0 = arith.constant 0 : i32
    %c0_i32_1 = arith.constant 0 : i32
    return %c0_i32, %c0_i32_0 : i32, i32
  }
  func.func @transform_2(%arg0: i32) -> (i32, i32) {
    %c0_i32 = arith.constant 0 : i32
    %c0_i32_0 = arith.constant 0 : i32
    %c0_i32_1 = arith.constant 0 : i32
    return %c0_i32, %c0_i32_0 : i32, i32
  }
  func.func @transform_3(%arg0: i32) -> (i32, i32) {
    %c0_i32 = arith.constant 0 : i32
    %c0_i32_0 = arith.constant 0 : i32
    %c0_i32_1 = arith.constant 0 : i32
    return %c0_i32, %c0_i32_0 : i32, i32
  }
  func.func @transform_4(%arg0: i32) -> (i32, i32) {
    %c0_i32 = arith.constant 0 : i32
    %c0_i32_0 = arith.constant 0 : i32
    %c0_i32_1 = arith.constant 0 : i32
    return %c0_i32, %c0_i32_0 : i32, i32
  }
  func.func @transform_5(%arg0: i32) -> (i32, i32) {
    %c0_i32 = arith.constant 0 : i32
    %c0_i32_0 = arith.constant 0 : i32
    return %arg0, %c0_i32 : i32, i32
  }
}

</mosaic_0001>

<llo_original>
// kernel: tpu_custom_call.1
$region0: #{tpu_custom_call.1}
  #allocation0 [shape = 'u32[]', space=smem, size = 0x4, offset = 0x4, fixed_abs, tag = 'smem constant byte address 0x4 - core index']
  #allocation1 [shape = 'u32[144,128]{1,0:T(1,128)}', space=vmem, size = 0x12000, scoped, tag = 'internal scratch']
  %s0 = inlined_call_operand.hbm [shape: bf16[16,128], index: 0, kind: input, shape index: {}]
  %s1 = inlined_call_operand.hbm [shape: bf16[128,128], index: 1, kind: input, shape index: {}]
  %s2 = inlined_call_operand.vmem [shape: f32[1,128], index: 2, kind: input, shape index: {}]
  %s3 = inlined_call_operand.hbm [shape: bf16[128,128], index: 3, kind: input, shape index: {}]
  %s4 = inlined_call_operand.vmem [shape: f32[1,128], index: 4, kind: input, shape index: {}]
  %s5 = inlined_call_operand.hbm [shape: f32[16,128], index: 5, kind: output, shape index: {}]
  %s6 = sld [smem:[#allocation0]]
  $region42: #{tpu_custom_call.1} parent=0
    _
  %s8 = ssub.s32 1, %s6
  %s9 = scalar_select 0, %s8, %s6
  $region1: #{tpu_custom_call.1} parent=0
    #allocation2 [shape = 'u8[4096]{0}', space=vmem, size = 0x1000, scoped, tag = 'input window, operand 0, single buffered']
    #allocation3 [shape = 's32[1]{0}', space=sflag, size = 0x4, scoped, tag = 'scoped memory for tpu_custom_call.1']
    #allocation4 [shape = 's32[1]{0}', space=sflag, size = 0x4, scoped, tag = 'scoped memory for tpu_custom_call.1']
    #allocation5 [shape = 'u8[32768]{0}', space=vmem, size = 0x8000, scoped, tag = 'input window, operand 1, single buffered']
    #allocation6 [shape = 's32[1]{0}', space=sflag, size = 0x4, scoped, tag = 'scoped memory for tpu_custom_call.1']
    #allocation7 [shape = 'u8[32768]{0}', space=vmem, size = 0x8000, scoped, tag = 'input window, operand 3, single buffered']
    #allocation8 [shape = 'u8[8192]{0}', space=vmem, size = 0x2000, scoped, tag = 'output window, operand 0, single buffered']
    %10 = vsyncpa [#allocation3], 0
    %11 = vsyncpa [#allocation6], 0
    %12 = vsyncpa [#allocation4], 0
    // Predicated region
    $region2: #{tpu_custom_call.1} parent=1 // pred_check
      _
    $region3: #{tpu_custom_call.1} parent=1 // pred_check_branch
      %14 = sbr.rel (0) target = $region5
    $region4: #{tpu_custom_call.1} parent=1 // pred_region
      %s16 = ssub.s32 128, 128
      %17 = vsyncadd [#allocation3], %s16
      %s18 = sshll.u32 [#allocation2], 4
      %s19 = int_to_ptr.vmem [resolvable:$true] %s18
      %24 = dma.hbm_to_vmem [thread:$0]  %s0, 128, %s19, [#allocation3], 64, 64, 4
    $region5: #{tpu_custom_call.1} parent=1 // pred_fallthru
      _
    // Predicated region
    $region6: #{tpu_custom_call.1} parent=1 // pred_check
      _
    $region7: #{tpu_custom_call.1} parent=1 // pred_check_branch
      %26 = sbr.rel (0) target = $region9
    $region8: #{tpu_custom_call.1} parent=1 // pred_region
      %s28 = ssub.s32 1024, 1024
      %29 = vsyncadd [#allocation6], %s28
      %s30 = sshll.u32 [#allocation5], 4
      %s31 = int_to_ptr.vmem [resolvable:$true] %s30
      %36 = dma.hbm_to_vmem [thread:$0]  %s1, 1024, %s31, [#allocation6], 64, 64, 4
    $region9: #{tpu_custom_call.1} parent=1 // pred_fallthru
      _
    // Predicated region
    $region10: #{tpu_custom_call.1} parent=1 // pred_check
      _
    $region11: #{tpu_custom_call.1} parent=1 // pred_check_branch
      %38 = sbr.rel (0) target = $region13
    $region12: #{tpu_custom_call.1} parent=1 // pred_region
      _
    $region13: #{tpu_custom_call.1} parent=1 // pred_fallthru
      _
    // Predicated region
    $region14: #{tpu_custom_call.1} parent=1 // pred_check
      _
    $region15: #{tpu_custom_call.1} parent=1 // pred_check_branch
      %40 = sbr.rel (0) target = $region17
    $region16: #{tpu_custom_call.1} parent=1 // pred_region
      %s42 = ssub.s32 1024, 1024
      %43 = vsyncadd [#allocation6], %s42
      %s44 = sshll.u32 [#allocation7], 4
      %s45 = int_to_ptr.vmem [resolvable:$true] %s44
      %50 = dma.hbm_to_vmem [thread:$0]  %s3, 1024, %s45, [#allocation6], 64, 64, 4
    $region17: #{tpu_custom_call.1} parent=1 // pred_fallthru
      _
    // Predicated region
    $region18: #{tpu_custom_call.1} parent=1 // pred_check
      _
    $region19: #{tpu_custom_call.1} parent=1 // pred_check_branch
      %52 = sbr.rel (0) target = $region21
    $region20: #{tpu_custom_call.1} parent=1 // pred_region
      _
    $region21: #{tpu_custom_call.1} parent=1 // pred_fallthru
      _
    // Predicated region
    $region22: #{tpu_custom_call.1} parent=1 // pred_check
      _
    $region23: #{tpu_custom_call.1} parent=1 // pred_check_branch
      %54 = sbr.rel (0) target = $region25
    $region24: #{tpu_custom_call.1} parent=1 // pred_region
      %55 = dma.done [#allocation3], 128
    $region25: #{tpu_custom_call.1} parent=1 // pred_fallthru
      _
    // Predicated region
    $region26: #{tpu_custom_call.1} parent=1 // pred_check
      _
    $region27: #{tpu_custom_call.1} parent=1 // pred_check_branch
      %57 = sbr.rel (0) target = $region29
    $region28: #{tpu_custom_call.1} parent=1 // pred_region
      %58 = dma.done [#allocation6], 1024
    $region29: #{tpu_custom_call.1} parent=1 // pred_fallthru
      _
    // Predicated region
    $region30: #{tpu_custom_call.1} parent=1 // pred_check
      _
    $region31: #{tpu_custom_call.1} parent=1 // pred_check_branch
      %60 = sbr.rel (0) target = $region33
    $region32: #{tpu_custom_call.1} parent=1 // pred_region
      %61 = dma.done [#allocation6], 1024
    $region33: #{tpu_custom_call.1} parent=1 // pred_fallthru
      _
    %v63 = vld [vmem:[#allocation2] sm:$0xf]
    %v64 = vld [vmem:[#allocation2 + $0x4] sm:$0xf]
    %v65 = vld [vmem:[#allocation5] sm:$0xf]
    %v66 = vld [vmem:[#allocation5 + $0x4] sm:$0xf]
    %v67 = vld [vmem:[#allocation5 + $0x8] sm:$0xf]
    %v68 = vld [vmem:[#allocation5 + $0xc] sm:$0xf]
    %v69 = vld [vmem:[#allocation5 + $0x10] sm:$0xf]
    %v70 = vld [vmem:[#allocation5 + $0x14] sm:$0xf]
    %v71 = vld [vmem:[#allocation5 + $0x18] sm:$0xf]
    %v72 = vld [vmem:[#allocation5 + $0x1c] sm:$0xf]
    %v73 = vld [vmem:[#allocation5 + $0x20] sm:$0xf]
    %v74 = vld [vmem:[#allocation5 + $0x24] sm:$0xf]
    %v75 = vld [vmem:[#allocation5 + $0x28] sm:$0xf]
    %v76 = vld [vmem:[#allocation5 + $0x2c] sm:$0xf]
    %v77 = vld [vmem:[#allocation5 + $0x30] sm:$0xf]
    %v78 = vld [vmem:[#allocation5 + $0x34] sm:$0xf]
    %v79 = vld [vmem:[#allocation5 + $0x38] sm:$0xf]
    %v80 = vld [vmem:[#allocation5 + $0x3c] sm:$0xf]
    %v81 = vld [vmem:[%s2] sm:$0x1]
    %v83 = vlaneseq
    %v84 = vshrl.u32 %v83, 7
    %v85 = vsub.s32 0, %v84
    %v86 = vrot.slane %v81, %v85
    %v90 = vunpack.c.l.b16 %v63
    %v91 = vunpack.c.l.b16 %v64
    %v92 = vpack.c.b16 %v91, %v90
    %v110 = vunpack.c.l.b16 %v65
    %v111 = vunpack.c.l.b16 %v66
    %v112 = vunpack.c.l.b16 %v67
    %v113 = vunpack.c.l.b16 %v68
    %v114 = vunpack.c.l.b16 %v69
    %v115 = vunpack.c.l.b16 %v70
    %v116 = vunpack.c.l.b16 %v71
    %v117 = vunpack.c.l.b16 %v72
    %v118 = vunpack.c.l.b16 %v73
    %v119 = vunpack.c.l.b16 %v74
    %v120 = vunpack.c.l.b16 %v75
    %v121 = vunpack.c.l.b16 %v76
    %v122 = vunpack.c.l.b16 %v77
    %v123 = vunpack.c.l.b16 %v78
    %v124 = vunpack.c.l.b16 %v79
    %v125 = vunpack.c.l.b16 %v80
    %v126 = vpack.c.b16 %v111, %v110
    %v127 = vpack.c.b16 %v113, %v112
    %v128 = vpack.c.b16 %v115, %v114
    %v129 = vpack.c.b16 %v117, %v116
    %v130 = vpack.c.b16 %v119, %v118
    %v131 = vpack.c.b16 %v121, %v120
    %v132 = vpack.c.b16 %v123, %v122
    %v133 = vpack.c.b16 %v125, %v124
    %142 = vmatprep.subr.bf16.mxu0 0
    %143 = vmatpush1.bf16.msra.mxu0 %v126
    %144 = vmatprep.subr.bf16.mxu0 0
    %145 = vmatpush1.bf16.msra.mxu0 %v127
    %146 = vmatprep.subr.bf16.mxu0 0
    %147 = vmatpush1.bf16.msra.mxu0 %v128
    %148 = vmatprep.subr.bf16.mxu0 0
    %149 = vmatpush1.bf16.msra.mxu0 %v129
    %150 = vmatprep.subr.bf16.mxu0 0
    %151 = vmatpush1.bf16.msra.mxu0 %v130
    %152 = vmatprep.subr.bf16.mxu0 0
    %153 = vmatpush1.bf16.msra.mxu0 %v131
    %154 = vmatprep.subr.bf16.mxu0 0
    %155 = vmatpush1.bf16.msra.mxu0 %v132
    %156 = vmatprep.subr.bf16.mxu0 0
    %157 = vmatpush1.bf16.msra.mxu0 %v133
    %158 = vmatprep.subr.bf16.mxu0 0
    %159 = vmatpush1.bf16.msra.mxu0 0
    %160 = vmatprep.subr.bf16.mxu0 0
    %161 = vmatpush1.bf16.msra.mxu0 0
    %162 = vmatprep.subr.bf16.mxu0 0
    %163 = vmatpush1.bf16.msra.mxu0 0
    %164 = vmatprep.subr.bf16.mxu0 0
    %165 = vmatpush1.bf16.msra.mxu0 0
    %166 = vmatprep.subr.bf16.mxu0 0
    %167 = vmatpush1.bf16.msra.mxu0 0
    %168 = vmatprep.subr.bf16.mxu0 0
    %169 = vmatpush1.bf16.msra.mxu0 0
    %170 = vmatprep.subr.bf16.mxu0 0
    %171 = vmatpush1.bf16.msra.mxu0 0
    %172 = vmatprep.subr.bf16.mxu0 0
    %173 = vmatpush1.bf16.msra.mxu0 0
    %174 = vmatprep.mubr.bf16.mxu0 0
    %175 = vmatmul.mubr.bf16.gmra.mrb[0].mxu0 %v92
    %v176 = vpop.f32.mrb[0].mxu0
    %v177 = vadd.f32 %v86, %v176
    %v178 = vpop.f32.mrb[0].mxu0
    %v179 = vpop.f32.mrb[0].mxu0
    %v180 = vadd.f32 %v86, %v179
    %v181 = vpop.f32.mrb[0].mxu0
    %182 = vdwg.mxu0
    %v183 = vmax.f32 %v177, 0.0
    %v184 = vmax.f32 %v180, 0.0
    %v185 = vld [vmem:[#allocation7] sm:$0xf]
    %v186 = vld [vmem:[#allocation7 + $0x4] sm:$0xf]
    %v187 = vld [vmem:[#allocation7 + $0x8] sm:$0xf]
    %v188 = vld [vmem:[#allocation7 + $0xc] sm:$0xf]
    %v189 = vld [vmem:[#allocation7 + $0x10] sm:$0xf]
    %v190 = vld [vmem:[#allocation7 + $0x14] sm:$0xf]
    %v191 = vld [vmem:[#allocation7 + $0x18] sm:$0xf]
    %v192 = vld [vmem:[#allocation7 + $0x1c] sm:$0xf]
    %v193 = vld [vmem:[#allocation7 + $0x20] sm:$0xf]
    %v194 = vld [vmem:[#allocation7 + $0x24] sm:$0xf]
    %v195 = vld [vmem:[#allocation7 + $0x28] sm:$0xf]
    %v196 = vld [vmem:[#allocation7 + $0x2c] sm:$0xf]
    %v197 = vld [vmem:[#allocation7 + $0x30] sm:$0xf]
    %v198 = vld [vmem:[#allocation7 + $0x34] sm:$0xf]
    %v199 = vld [vmem:[#allocation7 + $0x38] sm:$0xf]
    %v200 = vld [vmem:[#allocation7 + $0x3c] sm:$0xf]
    %v201 = vld [vmem:[%s4] sm:$0x1]
    %v202 = vpack.c.bf16 %v184, %v183
    %v204 = vlaneseq
    %v205 = vshrl.u32 %v204, 7
    %v206 = vsub.s32 0, %v205
    %v207 = vrot.slane %v201, %v206
    %v225 = vunpack.c.l.b16 %v185
    %v226 = vunpack.c.l.b16 %v186
    %v227 = vunpack.c.l.b16 %v187
    %v228 = vunpack.c.l.b16 %v188
    %v229 = vunpack.c.l.b16 %v189
    %v230 = vunpack.c.l.b16 %v190
    %v231 = vunpack.c.l.b16 %v191
    %v232 = vunpack.c.l.b16 %v192
    %v233 = vunpack.c.l.b16 %v193
    %v234 = vunpack.c.l.b16 %v194
    %v235 = vunpack.c.l.b16 %v195
    %v236 = vunpack.c.l.b16 %v196
    %v237 = vunpack.c.l.b16 %v197
    %v238 = vunpack.c.l.b16 %v198
    %v239 = vunpack.c.l.b16 %v199
    %v240 = vunpack.c.l.b16 %v200
    %v241 = vpack.c.b16 %v226, %v225
    %v242 = vpack.c.b16 %v228, %v227
    %v243 = vpack.c.b16 %v230, %v229
    %v244 = vpack.c.b16 %v232, %v231
    %v245 = vpack.c.b16 %v234, %v233
    %v246 = vpack.c.b16 %v236, %v235
    %v247 = vpack.c.b16 %v238, %v237
    %v248 = vpack.c.b16 %v240, %v239
    %257 = vmatprep.subr.bf16.mxu0 0
    %258 = vmatpush1.bf16.msra.mxu0 %v241
    %259 = vmatprep.subr.bf16.mxu0 0
    %260 = vmatpush1.bf16.msra.mxu0 %v242
    %261 = vmatprep.subr.bf16.mxu0 0
    %262 = vmatpush1.bf16.msra.mxu0 %v243
    %263 = vmatprep.subr.bf16.mxu0 0
    %264 = vmatpush1.bf16.msra.mxu0 %v244
    %265 = vmatprep.subr.bf16.mxu0 0
    %266 = vmatpush1.bf16.msra.mxu0 %v245
    %267 = vmatprep.subr.bf16.mxu0 0
    %268 = vmatpush1.bf16.msra.mxu0 %v246
    %269 = vmatprep.subr.bf16.mxu0 0
    %270 = vmatpush1.bf16.msra.mxu0 %v247
    %271 = vmatprep.subr.bf16.mxu0 0
    %272 = vmatpush1.bf16.msra.mxu0 %v248
    %273 = vmatprep.subr.bf16.mxu0 0
    %274 = vmatpush1.bf16.msra.mxu0 0
    %275 = vmatprep.subr.bf16.mxu0 0
    %276 = vmatpush1.bf16.msra.mxu0 0
    %277 = vmatprep.subr.bf16.mxu0 0
    %278 = vmatpush1.bf16.msra.mxu0 0
    %279 = vmatprep.subr.bf16.mxu0 0
    %280 = vmatpush1.bf16.msra.mxu0 0
    %281 = vmatprep.subr.bf16.mxu0 0
    %282 = vmatpush1.bf16.msra.mxu0 0
    %283 = vmatprep.subr.bf16.mxu0 0
    %284 = vmatpush1.bf16.msra.mxu0 0
    %285 = vmatprep.subr.bf16.mxu0 0
    %286 = vmatpush1.bf16.msra.mxu0 0
    %287 = vmatprep.subr.bf16.mxu0 0
    %288 = vmatpush1.bf16.msra.mxu0 0
    %289 = vmatprep.mubr.bf16.mxu0 0
    %290 = vmatmul.mubr.bf16.gmra.mrb[0].mxu0 %v202
    %v291 = vpop.f32.mrb[0].mxu0
    %v292 = vadd.f32 %v207, %v291
    %v293 = vpop.f32.mrb[0].mxu0
    %v294 = vpop.f32.mrb[0].mxu0
    %v295 = vadd.f32 %v207, %v294
    %v296 = vpop.f32.mrb[0].mxu0
    %297 = vdwg.mxu0
    %v298 = vmax.f32 %v292, 0.0
    %v299 = vmax.f32 %v295, 0.0
    %300 = vst [vmem:[#allocation8] sm:$0xff] %v298
    %301 = vst [vmem:[#allocation8 + $0x8] sm:$0xff] %v299
    // Predicated region
    $region34: #{tpu_custom_call.1} parent=1 // pred_check
      _
    $region35: #{tpu_custom_call.1} parent=1 // pred_check_branch
      %303 = sbr.rel (0) target = $region37
    $region36: #{tpu_custom_call.1} parent=1 // pred_region
      %s305 = ssub.s32 256, 256
      %306 = vsyncadd [#allocation4], %s305
      %s307 = sshll.u32 [#allocation8], 4
      %s308 = int_to_ptr.vmem [resolvable:$true] %s307
      %313 = dma.vmem_to_hbm [thread:$0]  %s308, 256, %s5, [#allocation4], 128, 128, 8
    $region37: #{tpu_custom_call.1} parent=1 // pred_fallthru
      _
    // Predicated region
    $region38: #{tpu_custom_call.1} parent=1 // pred_check
      _
    $region39: #{tpu_custom_call.1} parent=1 // pred_check_branch
      %315 = sbr.rel (0) target = $region41
    $region40: #{tpu_custom_call.1} parent=1 // pred_region
      %316 = dma.done [#allocation4], 256
    $region41: #{tpu_custom_call.1} parent=1 // pred_fallthru
      _
    %317 = vsyncpa [#allocation3], 1
    %318 = vsyncpa [#allocation6], 1
    %319 = vsyncpa [#allocation4], 1

</llo_original>
